<compile_context>
chip_gen: v7x
topology: tpu7x:2x2x1
jax: 0.10.0
libtpu: 0.0.40
codegen_flags: <defaults>
</compile_context>

<pallas_src>
import jax
import jax.numpy as jnp
from jax import lax
from jax.experimental import pallas as pl
from jax.experimental.pallas import tpu as pltpu


ROW_CAP = 32768          # max rows per batch tile (bounds pad waste / vreg pressure)
KTILE_MIN_ROWS = 512     # if the budget can't give this many rows, switch to K-tiling
KTILE_TB = 1024          # batch-tile size used on the K-tiled (very large D) path


def _round_up(x: int, m: int) -> int:
    return ((x + m - 1) // m) * m


def _select_vmem_budget():
    """Generation-aware (x-tile budget, vmem_limit cap) in bytes."""
    phys = 64 * 1024 * 1024                      # conservative default = v7x per-TC VMEM
    try:
        info = pltpu.get_tpu_info()
        phys = int(getattr(info, "vmem_capacity_bytes", phys))
    except Exception:
        pass
    if phys >= 100 * 1024 * 1024:                # v5e / v6e: 128 MiB physical VMEM
        return 56 * 1024 * 1024, 100 * 1024 * 1024
    return 24 * 1024 * 1024, 44 * 1024 * 1024    # v7x: 64 MiB -> leave compiler headroom


def _logreg_kernel(x_ref, w_ref, b_ref, o_ref, acc_ref):
    # x_ref: (tb, tk) VMEM, w_ref: (p, tk) VMEM, b_ref: (1,1) SMEM,
    # o_ref: (p, tb) VMEM (lane-dense), acc_ref: (p, tb) f32 VMEM scratch.
    k = pl.program_id(1)

    @pl.when(k == 0)
    def _init():
        acc_ref[...] = jnp.zeros_like(acc_ref)

    # GEMV as a transposed-RHS matmul: (p, tk) . (tb, tk)^T -> (p, tb),
    # so the result is lane-dense (unmasked stores, tiny VMEM footprint).
    acc_ref[...] += lax.dot_general(
        w_ref[...], x_ref[...],
        dimension_numbers=(((1,), (1,)), ((), ())),
        preferred_element_type=jnp.float32,
    )

    @pl.when(k == pl.num_programs(1) - 1)
    def _finalize():
        z = acc_ref[...] + b_ref[0, 0]                     # scalar bias from SMEM
        # exact sigmoid: single EUP tanh, no exp overflow, no approx error
        o_ref[...] = (0.5 * jnp.tanh(0.5 * z) + 0.5).astype(o_ref.dtype)


def logistic_regression_forward(x, w, b, *, x_budget_bytes=None):
    """sigmoid(x @ w.T + b).  x: (B, D) f32, w: (1, D) f32, b: (1,) f32 -> (B, 1) f32."""
    x = jnp.asarray(x, jnp.float32)
    w = jnp.asarray(w, jnp.float32).reshape(1, -1)
    b = jnp.asarray(b, jnp.float32).reshape(1, 1)
    B, D = x.shape

    x_budget, vmem_cap = _select_vmem_budget()
    if x_budget_bytes is not None:                  # test/tuning hook
        x_budget = int(x_budget_bytes)

    # ---- small-D lane repack: (B, D) -> (B/p, p*D == 128), block-diagonal weight ----
    if D < 128 and 128 % D == 0:
        p = 128 // D
        w_eff = (jnp.eye(p, dtype=jnp.float32)[:, :, None]
                 * w.reshape(-1)[None, None, :]).reshape(p, p * D)
        d_eff = p * D                               # == 128, fully lane-dense
        b_rows = -(-B // p)                         # logical rows of the packed layout
    else:
        p = 1
        w_eff = w
        d_eff = D
        b_rows = B

    lane_d = _round_up(d_eff, 128)                  # f32 lane padding of one x-tile row

    # ---- choose (tk, n_k): single K step unless the budget can't give big batch tiles ----
    tb_budget = (x_budget // (2 * lane_d * 4)) // 128 * 128
    if tb_budget >= KTILE_MIN_ROWS:
        tk, n_k, d_pad = d_eff, 1, d_eff
        tb_cap = max(128, min(ROW_CAP, tb_budget))
    else:                                           # very large D: K-tile the reduction
        tk = max(128, (x_budget // (2 * KTILE_TB * 4)) // 128 * 128)
        n_k = -(-d_eff // tk)
        d_pad = n_k * tk
        tb_cap = KTILE_TB

    # ---- split the batch evenly into the fewest 128-aligned tiles ----
    b8 = _round_up(max(b_rows, 1), 8)
    n_b = -(-b8 // tb_cap)
    if b8 >= 1024:
        n_b = max(2, n_b)                           # keep both v7x TensorCores busy
    if n_b > 1 and n_b % 2:
        n_b += 1                                    # even step count for 2-TC parts
    tb = b8 if n_b == 1 else _round_up(-(-b8 // n_b), 128)
    b_pad = tb * n_b

    # ---- lay out operands (row pad; metadata-only reshape for the repack path) ----
    rows_needed = b_pad * p
    if rows_needed != B:
        x = jnp.pad(x, ((0, rows_needed - B), (0, 0)))
    x_eff = x.reshape(b_pad, p * D) if p > 1 else x
    if d_pad != d_eff:                              # only on the K-tiled path
        x_eff = jnp.pad(x_eff, ((0, 0), (0, d_pad - d_eff)))
        w_eff = jnp.pad(w_eff, ((0, 0), (0, d_pad - d_eff)))

    # ---- VMEM accounting: db x tiles + db out tiles + weight buffers + accumulator ----
    lane_tk = _round_up(tk, 128)
    p8 = _round_up(p, 8)
    vmem_need = (2 * tb * lane_tk * 4
                 + 2 * p8 * lane_tk * 4
                 + 2 * p8 * tb * 4
                 + p8 * tb * 4)
    vmem_limit = int(min(vmem_cap, max(32 * 1024 * 1024, vmem_need + 8 * 1024 * 1024)))

    out = pl.pallas_call(
        _logreg_kernel,
        out_shape=jax.ShapeDtypeStruct((p, b_pad), jnp.float32),
        grid_spec=pltpu.PrefetchScalarGridSpec(
            num_scalar_prefetch=0,
            grid=(n_b, n_k),
            in_specs=[
                pl.BlockSpec((tb, tk), lambda i, k: (i, k)),        # x batch tile
                pl.BlockSpec((p, tk), lambda i, k: (0, k)),         # weight block (lane-dense)
                pl.BlockSpec(memory_space=pltpu.MemorySpace.SMEM),  # bias scalar in SMEM
            ],
            out_specs=pl.BlockSpec((p, tb), lambda i, k: (0, i)),   # lane-dense output slab
            scratch_shapes=[pltpu.VMEM((p, tb), jnp.float32)],      # f32 accumulator
        ),
        compiler_params=pltpu.CompilerParams(
            dimension_semantics=("parallel", "arbitrary"),
            vmem_limit_bytes=vmem_limit,
        ),
    )(x_eff, w_eff, b)

    # Layout plumbing only: un-scramble the (p, b_pad) slab back to a (B, 1) column.
    return out.T.reshape(-1)[:B].reshape(B, 1)


if __name__ == "__main__":
    key = jax.random.PRNGKey(0)
    kx, kw, kb, kx2, kx3, kw3, kb3 = jax.random.split(key, 7)

    batch, input_dim = 8, 32

    # Example input + deterministic nn.Linear(input_dim, 1)-shaped params.
    x = jax.random.normal(kx, (batch, input_dim), dtype=jnp.float32)
    bound = 1.0 / float(input_dim) ** 0.5
    w = jax.random.uniform(kw, (1, input_dim), jnp.float32, -bound, bound)
    b = jax.random.uniform(kb, (1,), jnp.float32, -bound, bound)

    out = jax.block_until_ready(logistic_regression_forward(x, w, b))
    ref = jax.nn.sigmoid(jnp.dot(x, w.T, precision=lax.Precision.HIGHEST) + b)
    assert out.shape == (batch, 1)
    assert jnp.allclose(out, ref, atol=1e-4, rtol=1e-4), "mismatch vs reference"

    # Batch not a multiple of the pack factor -> exercises the row-padding path.
    x2 = jax.random.normal(kx2, (5, input_dim), dtype=jnp.float32)
    out2 = jax.block_until_ready(logistic_regression_forward(x2, w, b))
    ref2 = jax.nn.sigmoid(jnp.dot(x2, w.T, precision=lax.Precision.HIGHEST) + b)
    assert out2.shape == (5, 1)
    assert jnp.allclose(out2, ref2, atol=1e-4, rtol=1e-4), "mismatch vs reference (padded)"

    # No-repack path + forced K-tiling (tiny budget) -> exercises the reduction grid axis.
    B3, D3 = 300, 512
    x3 = jax.random.normal(kx3, (B3, D3), dtype=jnp.float32)
    w3 = jax.random.uniform(kw3, (1, D3), jnp.float32, -0.05, 0.05)
    b3 = jax.random.uniform(kb3, (1,), jnp.float32, -0.05, 0.05)
    out3 = jax.block_until_ready(
        logistic_regression_forward(x3, w3, b3, x_budget_bytes=1 << 20))
    ref3 = jax.nn.sigmoid(jnp.dot(x3, w3.T, precision=lax.Precision.HIGHEST) + b3)
    assert out3.shape == (B3, 1)
    assert jnp.allclose(out3, ref3, atol=1e-4, rtol=1e-4), "mismatch vs reference (k-tiled)"

    print("KERNEL_OK")
</pallas_src>

<mosaic_0001>
module attributes {stable_mosaic.version = 11 : i64} {
  func.func @_logreg_kernel(%arg0: i32, %arg1: i32, %arg2: memref<8x128xf32, #tpu.memory_space<vmem>>, %arg3: memref<4x128xf32, #tpu.memory_space<vmem>>, %arg4: memref<1x1xf32, #tpu.memory_space<smem>>, %arg5: memref<4x8xf32, #tpu.memory_space<vmem>>, %arg6: memref<4x8xf32, #tpu.memory_space<vmem>>) attributes {dimension_semantics = [#tpu.dimension_semantics<parallel>, #tpu.dimension_semantics<arbitrary>], iteration_bounds = array<i64: 1, 1>, scalar_prefetch = 0 : i64, scratch_operands = 1 : i64, tpu.core_type = #tpu.core_type<tc>, window_params = [{transform_indices = @transform_0, window_bounds = array<i64: 8, 128>}, {transform_indices = @transform_1, window_bounds = array<i64: 4, 128>}, {transform_indices = @transform_2, window_bounds = array<i64: 1, 1>}, {transform_indices = @transform_3, window_bounds = array<i64: 4, 8>}]} {
    %c0_i32 = arith.constant 0 : i32
    %0 = arith.cmpi eq, %arg1, %c0_i32 : i32
    %1 = arith.extui %0 : i1 to i32
    %c0_i32_0 = arith.constant 0 : i32
    %2 = arith.cmpi ne, %1, %c0_i32_0 : i32
    scf.if %2 {
      %cst_10 = arith.constant 0.000000e+00 : f32
      %12 = vector.broadcast %cst_10 : f32 to vector<4x8xf32>
      %c0_11 = arith.constant 0 : index
      %c0_12 = arith.constant 0 : index
      %13 = vector.load %arg6[%c0_11, %c0_12] : memref<4x8xf32, #tpu.memory_space<vmem>>, vector<4x8xf32>
      tpu.vector_store %arg6[%c0_11, %c0_12], %12 {strides = array<i32>} : memref<4x8xf32, #tpu.memory_space<vmem>>, vector<4x8xf32>,
    } else {
    }
    %c0 = arith.constant 0 : index
    %c0_1 = arith.constant 0 : index
    %3 = vector.load %arg6[%c0, %c0_1] : memref<4x8xf32, #tpu.memory_space<vmem>>, vector<4x8xf32>
    %c0_2 = arith.constant 0 : index
    %c0_3 = arith.constant 0 : index
    %4 = vector.load %arg3[%c0_2, %c0_3] : memref<4x128xf32, #tpu.memory_space<vmem>>, vector<4x128xf32>
    %c0_4 = arith.constant 0 : index
    %c0_5 = arith.constant 0 : index
    %5 = vector.load %arg2[%c0_4, %c0_5] : memref<8x128xf32, #tpu.memory_space<vmem>>, vector<8x128xf32>
    %cst = arith.constant dense<0.000000e+00> : vector<4x8xf32>
    %6 = tpu.matmul %4, %5, %cst {dimension_numbers = #tpu.dot_dimension_numbers<[1], [1], [0], [0], [0, 0, 1, 0], [], []>} : vector<4x128xf32>, vector<8x128xf32>, vector<4x8xf32> -> vector<4x8xf32>
    %7 = arith.addf %3, %6 : vector<4x8xf32>
    %c0_6 = arith.constant 0 : index
    %c0_7 = arith.constant 0 : index
    %8 = vector.load %arg6[%c0_6, %c0_7] : memref<4x8xf32, #tpu.memory_space<vmem>>, vector<4x8xf32>
    tpu.vector_store %arg6[%c0_6, %c0_7], %7 {strides = array<i32>} : memref<4x8xf32, #tpu.memory_space<vmem>>, vector<4x8xf32>,
    %c0_i32_8 = arith.constant 0 : i32
    %9 = arith.cmpi eq, %arg1, %c0_i32_8 : i32
    %10 = arith.extui %9 : i1 to i32
    %c0_i32_9 = arith.constant 0 : i32
    %11 = arith.cmpi ne, %10, %c0_i32_9 : i32
    scf.if %11 {
      %c0_10 = arith.constant 0 : index
      %c0_11 = arith.constant 0 : index
      %12 = vector.load %arg6[%c0_10, %c0_11] : memref<4x8xf32, #tpu.memory_space<vmem>>, vector<4x8xf32>
      %c0_12 = arith.constant 0 : index
      %c0_13 = arith.constant 0 : index
      %13 = memref.load %arg4[%c0_12, %c0_13] : memref<1x1xf32, #tpu.memory_space<smem>>
      %14 = vector.broadcast %13 : f32 to vector<4x8xf32>
      %15 = arith.addf %12, %14 : vector<4x8xf32>
      %cst_14 = arith.constant 5.000000e-01 : f32
      %16 = vector.broadcast %cst_14 : f32 to vector<4x8xf32>
      %17 = arith.mulf %16, %15 : vector<4x8xf32>
      %18 = math.tanh %17 : vector<4x8xf32>
      %cst_15 = arith.constant 5.000000e-01 : f32
      %19 = vector.broadcast %cst_15 : f32 to vector<4x8xf32>
      %20 = arith.mulf %19, %18 : vector<4x8xf32>
      %cst_16 = arith.constant 5.000000e-01 : f32
      %21 = vector.broadcast %cst_16 : f32 to vector<4x8xf32>
      %22 = arith.addf %20, %21 : vector<4x8xf32>
      %c0_17 = arith.constant 0 : index
      %c0_18 = arith.constant 0 : index
      %23 = vector.load %arg5[%c0_17, %c0_18] : memref<4x8xf32, #tpu.memory_space<vmem>>, vector<4x8xf32>
      tpu.vector_store %arg5[%c0_17, %c0_18], %22 {strides = array<i32>} : memref<4x8xf32, #tpu.memory_space<vmem>>, vector<4x8xf32>,
    } else {
    }
    return
  }
  func.func @transform_0(%arg0: i32, %arg1: i32) -> (i32, i32) {
    %c0_i32 = arith.constant 0 : i32
    return %arg0, %arg1 : i32, i32
  }
  func.func @transform_1(%arg0: i32, %arg1: i32) -> (i32, i32) {
    %c0_i32 = arith.constant 0 : i32
    %c0_i32_0 = arith.constant 0 : i32
    return %c0_i32, %arg1 : i32, i32
  }
  func.func @transform_2(%arg0: i32, %arg1: i32) -> (i32, i32) {
    %c0_i32 = arith.constant 0 : i32
    %c0_i32_0 = arith.constant 0 : i32
    %c0_i32_1 = arith.constant 0 : i32
    return %c0_i32, %c0_i32_0 : i32, i32
  }
  func.func @transform_3(%arg0: i32, %arg1: i32) -> (i32, i32) {
    %c0_i32 = arith.constant 0 : i32
    %c0_i32_0 = arith.constant 0 : i32
    return %c0_i32, %arg0 : i32, i32
  }
}

</mosaic_0001>

<llo_original>
// kernel: tpu_custom_call.1
$region0: #{tpu_custom_call.1}
  #allocation0 [shape = 'u32[]', space=smem, size = 0x4, offset = 0x4, fixed_abs, tag = 'smem constant byte address 0x4 - core index']
  #allocation1 [shape = 'u32[144,128]{1,0:T(1,128)}', space=vmem, size = 0x12000, scoped, tag = 'internal scratch']
  #allocation2 [shape = 'f32[4,8]{1,0:T(4,128)}', space=vmem, size = 0x800, scoped, tag = 'scratch operand']
  #allocation3 [shape = 'f32[1,1]{1,0:T(1,128)S(6)}', space=smem, size = 0x200, scoped, tag = 'scoped memory for tpu_custom_call.1']
  %s0 = inlined_call_operand.hbm [shape: f32[8,128], index: 0, kind: input, shape index: {}]
  %s1 = inlined_call_operand.vmem [shape: f32[4,128], index: 1, kind: input, shape index: {}]
  %s2 = inlined_call_operand.<no memory space> [shape: f32[1,1], index: 2, kind: input, shape index: {}]
  %s3 = inlined_call_operand.hbm [shape: f32[4,8], index: 3, kind: output, shape index: {}]
  %s4 = sld [smem:[#allocation0]]
  $region34: #{tpu_custom_call.1} parent=0
    _
  %s6 = ssub.s32 1, %s4
  %s7 = scalar_select 0, %s6, %s4
  %8 = sst [smem:[#allocation3]] %s2
  $region1: #{tpu_custom_call.1} parent=0
    #allocation4 [shape = 'u8[4096]{0}', space=vmem, size = 0x1000, scoped, tag = 'input window, operand 0, single buffered']
    #allocation5 [shape = 's32[1]{0}', space=sflag, size = 0x4, scoped, tag = 'scoped memory for tpu_custom_call.1']
    #allocation6 [shape = 's32[1]{0}', space=sflag, size = 0x4, scoped, tag = 'scoped memory for tpu_custom_call.1']
    #allocation7 [shape = 'u8[2048]{0}', space=vmem, size = 0x800, scoped, tag = 'output window, operand 0, single buffered']
    %9 = vsyncpa [#allocation5], 0
    %10 = vsyncpa [#allocation6], 0
    // Predicated region
    $region2: #{tpu_custom_call.1} parent=1 // pred_check
      _
    $region3: #{tpu_custom_call.1} parent=1 // pred_check_branch
      %12 = sbr.rel (0) target = $region5
    $region4: #{tpu_custom_call.1} parent=1 // pred_region
      %s14 = ssub.s32 128, 128
      %15 = vsyncadd [#allocation5], %s14
      %s17 = sshll.u32 [#allocation4], 4
      %s18 = int_to_ptr.vmem [resolvable:$true] %s17
      %20 = dma.hbm_to_vmem [thread:$0]  %s0, 128, %s18, [#allocation5]
    $region5: #{tpu_custom_call.1} parent=1 // pred_fallthru
      _
    // Predicated region
    $region6: #{tpu_custom_call.1} parent=1 // pred_check
      _
    $region7: #{tpu_custom_call.1} parent=1 // pred_check_branch
      %22 = sbr.rel (0) target = $region9
    $region8: #{tpu_custom_call.1} parent=1 // pred_region
      _
    $region9: #{tpu_custom_call.1} parent=1 // pred_fallthru
      _
    // Predicated region
    $region10: #{tpu_custom_call.1} parent=1 // pred_check
      _
    $region11: #{tpu_custom_call.1} parent=1 // pred_check_branch
      %24 = sbr.rel (0) target = $region13
    $region12: #{tpu_custom_call.1} parent=1 // pred_region
      _
    $region13: #{tpu_custom_call.1} parent=1 // pred_fallthru
      _
    // Predicated region
    $region14: #{tpu_custom_call.1} parent=1 // pred_check
      _
    $region15: #{tpu_custom_call.1} parent=1 // pred_check_branch
      %26 = sbr.rel (0) target = $region17
    $region16: #{tpu_custom_call.1} parent=1 // pred_region
      %27 = dma.done [#allocation5], 128
    $region17: #{tpu_custom_call.1} parent=1 // pred_fallthru
      _
    %p28 = scmp.eq.s32.totalorder 0, 0
    // Predicated region
    $region18: #{tpu_custom_call.1} parent=1 // pred_check
      %p29 = pneg %p28
    $region19: #{tpu_custom_call.1} parent=1 // pred_check_branch
      %31 = sbr.rel (%p29) target = $region21
    $region20: #{tpu_custom_call.1} parent=1 // pred_region
      %vm32 = vcmask 60416
      %33 = vst.msk [vmem:[#allocation2] sm:$0xf] %vm32, 0.0
    $region21: #{tpu_custom_call.1} parent=1 // pred_fallthru
      _
    %v34 = vld [vmem:[#allocation2] sm:$0xf]
    %v35 = vld [vmem:[%s1] sm:$0xf]
    %v36 = vld [vmem:[#allocation4] sm:$0xff]
    %37 = vmatprep.subr.mxu0 0.0
    %38 = vmatpush1.xpose.msra.mxu0 %v36
    %39 = vmatprep.subr.mxu0 0.0
    %40 = vmatpush1.xpose.msra.mxu0 0.0
    %41 = vmatprep.subr.mxu0 0.0
    %42 = vmatpush1.xpose.msra.mxu0 0.0
    %43 = vmatprep.subr.mxu0 0.0
    %44 = vmatpush1.xpose.msra.mxu0 0.0
    %45 = vmatprep.subr.mxu0 0.0
    %46 = vmatpush1.xpose.msra.mxu0 0.0
    %47 = vmatprep.subr.mxu0 0.0
    %48 = vmatpush1.xpose.msra.mxu0 0.0
    %49 = vmatprep.subr.mxu0 0.0
    %50 = vmatpush1.xpose.msra.mxu0 0.0
    %51 = vmatprep.subr.mxu0 0.0
    %52 = vmatpush1.xpose.msra.mxu0 0.0
    %53 = vmatprep.subr.mxu0 0.0
    %54 = vmatpush1.xpose.msra.mxu0 0.0
    %55 = vmatprep.subr.mxu0 0.0
    %56 = vmatpush1.xpose.msra.mxu0 0.0
    %57 = vmatprep.subr.mxu0 0.0
    %58 = vmatpush1.xpose.msra.mxu0 0.0
    %59 = vmatprep.subr.mxu0 0.0
    %60 = vmatpush1.xpose.msra.mxu0 0.0
    %61 = vmatprep.subr.mxu0 0.0
    %62 = vmatpush1.xpose.msra.mxu0 0.0
    %63 = vmatprep.subr.mxu0 0.0
    %64 = vmatpush1.xpose.msra.mxu0 0.0
    %65 = vmatprep.subr.mxu0 0.0
    %66 = vmatpush1.xpose.msra.mxu0 0.0
    %67 = vmatprep.subr.mxu0 0.0
    %68 = vmatpush1.xpose.msra.mxu0 0.0
    %69 = vmatprep.subr.mxu0 0.0
    %70 = vmatpush1.xpose.msra.mxu0 0.0
    %71 = vmatprep.subr.mxu0 0.0
    %72 = vmatpush1.xpose.msra.mxu0 0.0
    %73 = vmatprep.subr.mxu0 0.0
    %74 = vmatpush1.xpose.msra.mxu0 0.0
    %75 = vmatprep.subr.mxu0 0.0
    %76 = vmatpush1.xpose.msra.mxu0 0.0
    %77 = vmatprep.subr.mxu0 0.0
    %78 = vmatpush1.xpose.msra.mxu0 0.0
    %79 = vmatprep.subr.mxu0 0.0
    %80 = vmatpush1.xpose.msra.mxu0 0.0
    %81 = vmatprep.subr.mxu0 0.0
    %82 = vmatpush1.xpose.msra.mxu0 0.0
    %83 = vmatprep.subr.mxu0 0.0
    %84 = vmatpush1.xpose.msra.mxu0 0.0
    %85 = vmatprep.subr.mxu0 0.0
    %86 = vmatpush1.xpose.msra.mxu0 0.0
    %87 = vmatprep.subr.mxu0 0.0
    %88 = vmatpush1.xpose.msra.mxu0 0.0
    %89 = vmatprep.subr.mxu0 0.0
    %90 = vmatpush1.xpose.msra.mxu0 0.0
    %91 = vmatprep.subr.mxu0 0.0
    %92 = vmatpush1.xpose.msra.mxu0 0.0
    %93 = vmatprep.subr.mxu0 0.0
    %94 = vmatpush1.xpose.msra.mxu0 0.0
    %95 = vmatprep.subr.mxu0 0.0
    %96 = vmatpush1.xpose.msra.mxu0 0.0
    %97 = vmatprep.subr.mxu0 0.0
    %98 = vmatpush1.xpose.msra.mxu0 0.0
    %99 = vmatprep.subr.mxu0 0.0
    %100 = vmatpush1.xpose.msra.mxu0 0.0
    %101 = vmatprep.mubr.f32.mxu0 0.0
    %102 = vmatmul.mubr.f32.gmra.mrb[0].mxu0 %v35
    %v103 = vpop.f32.mrb[0].mxu0
    %v104 = vadd.f32 0.0, %v103
    %v105 = vpop.f32.mrb[0].mxu0
    %106 = vdwg.mxu0
    %v107 = vadd.f32 %v34, %v104
    %vm108 = vcmask 60416
    %109 = vst.msk [vmem:[#allocation2] sm:$0xf] %vm108, %v107
    // Predicated region
    $region22: #{tpu_custom_call.1} parent=1 // pred_check
      %p110 = pneg %p28
    $region23: #{tpu_custom_call.1} parent=1 // pred_check_branch
      %112 = sbr.rel (%p110) target = $region25
    $region24: #{tpu_custom_call.1} parent=1 // pred_region
      %v113 = vld [vmem:[#allocation2] sm:$0xf]
      %s114 = sld [smem:[#allocation3]]
      %v115 = vstv %s114
      %v116 = vadd.f32 %v113, %v115
      %v117 = vmul.f32 %v116, 0.5
      %v118 = vtanh.pop %v117
      %v119 = vmul.f32 %v118, 0.5
      %v120 = vadd.f32 %v119, 0.5
      %121 = vst.msk [vmem:[#allocation7] sm:$0xf] %vm108, %v120
    $region25: #{tpu_custom_call.1} parent=1 // pred_fallthru
      _
    // Predicated region
    $region26: #{tpu_custom_call.1} parent=1 // pred_check
      _
    $region27: #{tpu_custom_call.1} parent=1 // pred_check_branch
      %123 = sbr.rel (0) target = $region29
    $region28: #{tpu_custom_call.1} parent=1 // pred_region
      %s125 = ssub.s32 64, 64
      %126 = vsyncadd [#allocation6], %s125
      %s128 = sshll.u32 [#allocation7], 4
      %s129 = int_to_ptr.vmem [resolvable:$true] %s128
      %131 = dma.vmem_to_hbm [thread:$0]  %s129, 64, %s3, [#allocation6]
    $region29: #{tpu_custom_call.1} parent=1 // pred_fallthru
      _
    // Predicated region
    $region30: #{tpu_custom_call.1} parent=1 // pred_check
      _
    $region31: #{tpu_custom_call.1} parent=1 // pred_check_branch
      %133 = sbr.rel (0) target = $region33
    $region32: #{tpu_custom_call.1} parent=1 // pred_region
      %134 = dma.done [#allocation6], 64
    $region33: #{tpu_custom_call.1} parent=1 // pred_fallthru
      _
    %135 = vsyncpa [#allocation5], 1
    %136 = vsyncpa [#allocation6], 1

</llo_original>
